<compile_context>
chip_gen: v6e
topology: v6e:2x2x1
jax: 0.10.0
libtpu: 0.0.40
codegen_flags: <defaults>
</compile_context>

<pallas_src>
import functools
import math

import jax
import jax.numpy as jnp
from jax.experimental import pallas as pl
from jax.experimental.pallas import tpu as pltpu


def _round_up(x, m):
    return (x + m - 1) // m * m


def spatial_gate_kernel(data_ref, gate_in_ref, w_ref, b_ref, out_ref, *,
                        activation, tau, num_groups, cpg):
    """One (batch, spatial-tile) grid step.

    data_ref:    [C, T]   data tile
    gate_in_ref: [C, T]   gate-conv input tile
    w_ref:       [G, C]   1x1 conv weight (resident, input dtype)
    b_ref:       [G, 1]   1x1 conv bias   (resident, f32)
    out_ref:     [C, T]
    """
    # 1x1 conv == per-pixel matmul over channels: [G, C] @ [C, T] -> [G, T].
    # Native-dtype operands, f32 accumulator; no full-tile cast, no HIGHEST.
    logits = jnp.dot(w_ref[...], gate_in_ref[...],
                     preferred_element_type=jnp.float32) + b_ref[...]

    if activation == "ReTanH":
        gate = jnp.maximum(jnp.tanh(logits), 0.0)
    elif activation == "Sigmoid":
        gate = jax.nn.sigmoid(logits)
    elif activation == "GeReTanH":
        ttau = math.tanh(tau)
        gate = jnp.maximum((jnp.tanh(logits - tau) + ttau) / (1.0 + ttau), 0.0)
    else:
        raise NotImplementedError(activation)

    gate = gate.astype(out_ref.dtype)                       # [G, T]

    if num_groups == 1:
        out_ref[...] = data_ref[...] * gate                 # [C,T] * [1,T]
    else:
        # Static (unrolled) loop over groups; keeps streams sublane-dense.
        for g in range(num_groups):
            sl = slice(g * cpg, (g + 1) * cpg)
            out_ref[sl, :] = data_ref[sl, :] * gate[g:g + 1, :]


def spatial_gate_forward(data_input, gate_input, conv_weight, conv_bias,
                         num_groups=1, gate_activation="ReTanH", tau=0.0,
                         target_tile_bytes=1 << 20,
                         vmem_budget_bytes=40 * 1024 * 1024):
    """data_input, gate_input: [B, C, H, W] (NCHW, matching PyTorch).
    conv_weight: [G, C, 1, 1]; conv_bias: [G]."""
    B, C, H, W = data_input.shape
    G = int(num_groups)
    assert C % G == 0
    cpg = C // G
    HW = H * W
    itemsize = data_input.dtype.itemsize

    # Spatial tile sized by bytes (~target_tile_bytes per streamed [C, T]
    # tile), lane-dense (multiple of 128), bounded by the double-buffered
    # working-set budget (3 streams x 2 buffers).
    tile_by_bytes = max(1, target_tile_bytes // (C * itemsize))
    tile_by_vmem = max(1, vmem_budget_bytes // (6 * C * itemsize))
    tile_hw = min(tile_by_bytes, tile_by_vmem)
    tile_hw = max(128, (tile_hw // 128) * 128)
    tile_hw = min(tile_hw, _round_up(HW, 128))

    # v7x has 2 TensorCores; keep the grid product >= 2 whenever possible so
    # neither core idles on this mem-bound kernel.
    while B * pl.cdiv(HW, tile_hw) < 2 and tile_hw > 128:
        tile_hw = max(128, ((tile_hw // 2) // 128) * 128)

    num_tiles = pl.cdiv(HW, tile_hw)

    # Free reshapes of contiguous NCHW; no padding, no copies.
    data_3d = data_input.reshape(B, C, HW)
    gate_3d = gate_input.reshape(B, C, HW)

    # True-width weight [G, C] (input dtype, avoids in-kernel tile casts) and
    # f32 bias [G, 1] -- no [C, C] expansion.
    w2 = conv_weight.reshape(G, C).astype(gate_input.dtype)
    b2 = conv_bias.reshape(G, 1).astype(jnp.float32)

    # Explicit scoped-VMEM limit: double-buffered streams + resident params
    # + small f32 temporaries, with headroom.  Deterministic across
    # generations; capped well under v7x's 64 MiB/TC.
    footprint = 6 * C * tile_hw * itemsize            # data / gate_in / out x2
    footprint += 4 * max(G, 8) * tile_hw * 4          # logits / gate temps
    footprint += 2 * max(G, 8) * _round_up(C, 128) * 4   # resident w / b
    vmem_limit = min(max(footprint + (8 << 20), 16 << 20), 48 << 20)

    kernel = functools.partial(spatial_gate_kernel,
                               activation=gate_activation, tau=tau,
                               num_groups=G, cpg=cpg)

    out_3d = pl.pallas_call(
        kernel,
        out_shape=jax.ShapeDtypeStruct((B, C, HW), data_input.dtype),
        grid_spec=pltpu.PrefetchScalarGridSpec(
            num_scalar_prefetch=0,
            grid=(B, num_tiles),
            in_specs=[
                # data tile [C, T]
                pl.BlockSpec((None, C, tile_hw), lambda b, j: (b, 0, j)),
                # gate-conv input tile [C, T]
                pl.BlockSpec((None, C, tile_hw), lambda b, j: (b, 0, j)),
                # resident weight / bias
                pl.BlockSpec((G, C), lambda b, j: (0, 0)),
                pl.BlockSpec((G, 1), lambda b, j: (0, 0)),
            ],
            out_specs=pl.BlockSpec((None, C, tile_hw), lambda b, j: (b, 0, j)),
        ),
        compiler_params=pltpu.CompilerParams(
            dimension_semantics=("parallel", "parallel"),
            vmem_limit_bytes=vmem_limit),
        cost_estimate=pl.CostEstimate(
            flops=2 * B * G * C * HW + B * C * HW,
            transcendentals=B * G * HW,
            bytes_accessed=3 * B * C * HW * itemsize),
    )(data_3d, gate_3d, w2, b2)

    return out_3d.reshape(B, C, H, W)


def _reference_forward(data_input, gate_input, conv_weight, conv_bias,
                       num_groups=1):
    """Pure-JAX reference mirroring the PyTorch module (ReTanH, 1x1 conv)."""
    B, C, H, W = data_input.shape
    G = num_groups
    w2 = conv_weight.reshape(G, C)
    logits = jnp.einsum("bchw,gc->bghw", gate_input, w2,
                        precision=jax.lax.Precision.HIGHEST)
    logits = logits + conv_bias[None, :, None, None]
    gate = jnp.maximum(jnp.tanh(logits), 0.0)
    data = data_input.reshape(B * G, C // G, H, W)
    gate_e = gate.reshape(B * G, 1, H, W)
    return (data * gate_e).reshape(B, C, H, W)


# TODO(synk): running_cost bookkeeping (get_running_cost callback) and the
# optional masked_func hook are host-side / training-time features outside
# the numeric forward hot path; not implemented in the kernel.

if __name__ == "__main__":
    B, C, H, W = 2, 4, 16, 16
    num_groups = 1
    init_gate = 0.99

    key = jax.random.PRNGKey(0)
    k_data, k_gate, k_w = jax.random.split(key, 3)

    data_input = jax.random.normal(k_data, (B, C, H, W), dtype=jnp.float32)
    gate_input = jax.random.normal(k_gate, (B, C, H, W), dtype=jnp.float32)

    # Parameter init matching SpatialGate.init_parameters (ReTanH):
    #   weight ~ N(0, 0.01), bias = 0.5 * log((1 + init_gate) / (1 - init_gate))
    conv_weight = 0.01 * jax.random.normal(
        k_w, (num_groups, C, 1, 1), dtype=jnp.float32)
    bias_value = 0.5 * math.log((1 + init_gate) / (1 - init_gate))
    conv_bias = jnp.full((num_groups,), bias_value, dtype=jnp.float32)

    out = spatial_gate_forward(data_input, gate_input, conv_weight, conv_bias,
                               num_groups=num_groups,
                               gate_activation="ReTanH")
    out = jax.block_until_ready(out)

    ref = _reference_forward(data_input, gate_input, conv_weight, conv_bias,
                             num_groups=num_groups)
    assert out.shape == (B, C, H, W)
    # Default-precision MXU accumulation vs HIGHEST-precision reference; the
    # gate goes through tanh so drift is benign.
    assert jnp.allclose(out, ref, atol=1e-3, rtol=1e-3), "mismatch vs reference"

    print("KERNEL_OK")
</pallas_src>

<mosaic_0001>
module attributes {stable_mosaic.version = 11 : i64} {
  func.func @spatial_gate_kernel(%arg0: i32, %arg1: i32, %arg2: memref<1x4x256xf32, #tpu.memory_space<vmem>>, %arg3: memref<1x4x256xf32, #tpu.memory_space<vmem>>, %arg4: memref<1x4xf32, #tpu.memory_space<vmem>>, %arg5: memref<1x1xf32, #tpu.memory_space<vmem>>, %arg6: memref<1x4x256xf32, #tpu.memory_space<vmem>>) attributes {dimension_semantics = [#tpu.dimension_semantics<parallel>, #tpu.dimension_semantics<parallel>], iteration_bounds = array<i64: 2, 1>, scalar_prefetch = 0 : i64, scratch_operands = 0 : i64, tpu.core_type = #tpu.core_type<tc>, window_params = [{transform_indices = @transform_0, window_bounds = array<i64: 1, 4, 256>}, {transform_indices = @transform_1, window_bounds = array<i64: 1, 4, 256>}, {pipeline_mode = #tpu.pipeline_mode<synchronous>, transform_indices = @transform_2, window_bounds = array<i64: 1, 4>}, {pipeline_mode = #tpu.pipeline_mode<synchronous>, transform_indices = @transform_3, window_bounds = array<i64: 1, 1>}, {transform_indices = @transform_4, window_bounds = array<i64: 1, 4, 256>}]} {
    %c0 = arith.constant 0 : index
    %c0_0 = arith.constant 0 : index
    %0 = vector.load %arg4[%c0, %c0_0] : memref<1x4xf32, #tpu.memory_space<vmem>>, vector<1x4xf32>
    %c0_1 = arith.constant 0 : index
    %c0_2 = arith.constant 0 : index
    %c0_3 = arith.constant 0 : index
    %1 = vector.load %arg3[%c0_1, %c0_2, %c0_3] : memref<1x4x256xf32, #tpu.memory_space<vmem>>, vector<1x4x256xf32>
    %2 = vector.shape_cast %1 : vector<1x4x256xf32> to vector<4x256xf32>
    %cst = arith.constant dense<0.000000e+00> : vector<1x256xf32>
    %3 = tpu.matmul %0, %2, %cst {dimension_numbers = #tpu.dot_dimension_numbers<[1], [0], [0], [1], [0, 0, 1, 1], [], []>} : vector<1x4xf32>, vector<4x256xf32>, vector<1x256xf32> -> vector<1x256xf32>
    %c0_4 = arith.constant 0 : index
    %c0_5 = arith.constant 0 : index
    %4 = vector.load %arg5[%c0_4, %c0_5] : memref<1x1xf32, #tpu.memory_space<vmem>>, vector<1x1xf32>
    %5 = vector.broadcast %4 : vector<1x1xf32> to vector<1x256xf32>
    %6 = arith.addf %3, %5 : vector<1x256xf32>
    %7 = math.tanh %6 : vector<1x256xf32>
    %cst_6 = arith.constant 0.000000e+00 : f32
    %8 = vector.broadcast %cst_6 : f32 to vector<1x256xf32>
    %9 = arith.maximumf %7, %8 : vector<1x256xf32>
    %c0_7 = arith.constant 0 : index
    %c0_8 = arith.constant 0 : index
    %c0_9 = arith.constant 0 : index
    %10 = vector.load %arg2[%c0_7, %c0_8, %c0_9] : memref<1x4x256xf32, #tpu.memory_space<vmem>>, vector<1x4x256xf32>
    %11 = vector.shape_cast %10 : vector<1x4x256xf32> to vector<4x256xf32>
    %12 = vector.broadcast %9 : vector<1x256xf32> to vector<4x256xf32>
    %13 = arith.mulf %11, %12 : vector<4x256xf32>
    %c0_10 = arith.constant 0 : index
    %c0_11 = arith.constant 0 : index
    %c0_12 = arith.constant 0 : index
    %14 = vector.load %arg6[%c0_10, %c0_11, %c0_12] : memref<1x4x256xf32, #tpu.memory_space<vmem>>, vector<1x4x256xf32>
    %15 = vector.shape_cast %14 : vector<1x4x256xf32> to vector<4x256xf32>
    %16 = vector.shape_cast %13 : vector<4x256xf32> to vector<1x4x256xf32>
    tpu.vector_store %arg6[%c0_10, %c0_11, %c0_12], %16 {strides = array<i32>} : memref<1x4x256xf32, #tpu.memory_space<vmem>>, vector<1x4x256xf32>,
    return
  }
  func.func @transform_0(%arg0: i32, %arg1: i32) -> (i32, i32, i32) {
    %c0_i32 = arith.constant 0 : i32
    %c0_i32_0 = arith.constant 0 : i32
    return %arg0, %c0_i32, %arg1 : i32, i32, i32
  }
  func.func @transform_1(%arg0: i32, %arg1: i32) -> (i32, i32, i32) {
    %c0_i32 = arith.constant 0 : i32
    %c0_i32_0 = arith.constant 0 : i32
    return %arg0, %c0_i32, %arg1 : i32, i32, i32
  }
  func.func @transform_2(%arg0: i32, %arg1: i32) -> (i32, i32) {
    %c0_i32 = arith.constant 0 : i32
    %c0_i32_0 = arith.constant 0 : i32
    %c0_i32_1 = arith.constant 0 : i32
    return %c0_i32, %c0_i32_0 : i32, i32
  }
  func.func @transform_3(%arg0: i32, %arg1: i32) -> (i32, i32) {
    %c0_i32 = arith.constant 0 : i32
    %c0_i32_0 = arith.constant 0 : i32
    %c0_i32_1 = arith.constant 0 : i32
    return %c0_i32, %c0_i32_0 : i32, i32
  }
  func.func @transform_4(%arg0: i32, %arg1: i32) -> (i32, i32, i32) {
    %c0_i32 = arith.constant 0 : i32
    %c0_i32_0 = arith.constant 0 : i32
    return %arg0, %c0_i32, %arg1 : i32, i32, i32
  }
}

</mosaic_0001>

<llo_original>
// kernel: tpu_custom_call.1
$region0: #{tpu_custom_call.1}
  #allocation0 [shape = 'u32[]', space=smem, size = 0x4, offset = 0x4, fixed_abs, tag = 'smem constant byte address 0x4 - core index']
  #allocation1 [shape = 'u32[144,128]{1,0:T(1,128)}', space=vmem, size = 0x12000, scoped, tag = 'internal scratch']
  #allocation2 [shape = 'f32[1,1]{1,0:T(1,128)S(1)}', space=vmem, size = 0x200, scoped, tag = 'scoped memory for tpu_custom_call.1']
  %s0 = inlined_call_operand.hbm [shape: f32[2,4,256], index: 0, kind: input, shape index: {}]
  %s1 = inlined_call_operand.hbm [shape: f32[2,4,256], index: 1, kind: input, shape index: {}]
  %s2 = inlined_call_operand.vmem [shape: f32[1,4], index: 2, kind: input, shape index: {}]
  %s3 = inlined_call_operand.<no memory space> [shape: f32[1,1], index: 3, kind: input, shape index: {}]
  %s4 = inlined_call_operand.hbm [shape: f32[2,4,256], index: 4, kind: output, shape index: {}]
  %s5 = sld [smem:[#allocation0]]
  $region57: #{tpu_custom_call.1} parent=0
    _
  %s7 = ssub.s32 1, %s5
  %s8 = scalar_select 0, %s7, %s5
  %v9 = vstv %s3
  %10 = vst [vmem:[#allocation2] sm:$0x1] %v9
  $region1: #{tpu_custom_call.1} parent=0
    #allocation3 [shape = 'u8[8192]{0}', space=vmem, size = 0x2000, scoped, tag = 'input window, operand 0']
    #allocation4 [shape = 's32[2]{0}', space=sflag, size = 0x8, scoped, tag = 'scoped memory for tpu_custom_call.1']
    #allocation5 [shape = 's32[2]{0}', space=sflag, size = 0x8, scoped, tag = 'scoped memory for tpu_custom_call.1']
    #allocation6 [shape = 'u8[8192]{0}', space=vmem, size = 0x2000, scoped, tag = 'input window, operand 1']
    #allocation7 [shape = 's32[2]{0}', space=sflag, size = 0x8, scoped, tag = 'scoped memory for tpu_custom_call.1']
    #allocation8 [shape = 'u8[8192]{0}', space=vmem, size = 0x2000, scoped, tag = 'output window, operand 0']
    %11 = vsyncpa [#allocation4], 0
    %s12 = scalar_lea.sflag [#allocation4], 1
    %13 = vsyncpa %s12, 0
    %14 = vsyncpa [#allocation7], 0
    %s15 = scalar_lea.sflag [#allocation7], 1
    %16 = vsyncpa %s15, 0
    %17 = vsyncpa [#allocation5], 0
    %s18 = scalar_lea.sflag [#allocation5], 1
    %19 = vsyncpa %s18, 0
    loop: start=0, step=1, limit=4
    $region2: #{tpu_custom_call.1} parent=1 // loop_pre_header
      _
    $region3: #{tpu_custom_call.1} parent=1 // loop_header
      %s21 = sphi 0, %s25
      %p22 = scmp.ge.s32.totalorder %s21, 4
      %s28 = sphi 0, %s40
      %s29 = sphi 0, %s36
      %s30 = sphi 0, %s28
      %s31 = sphi 0, %s29
      %s32 = sphi 0, %s30
      %s33 = sphi 0, %s31
      %s45 = sphi 0, %s47
      %s48 = sphi 0, %s45
      %s49 = sphi 0, %s48
      %s65 = sphi 0, %s49
      %s73 = sphi 0, %s75
      %s76 = sphi 0, %s73
      %s77 = sphi 0, %s76
      %s93 = sphi 0, %s77
      %s97 = sphi 0, %s97
      %s99 = sphi 0, %s97
      %s100 = sphi 0, %s99
      %s114 = sphi 0, %s100
      %s118 = sphi 0, %s118
      %s120 = sphi 0, %s118
      %s121 = sphi 0, %s120
      %s135 = sphi 0, %s121
      %s143 = sphi 0, %s145
      %s146 = sphi 0, %s143
      %s147 = sphi 0, %s146
      %s163 = sphi 0, %s147
    $region4: #{tpu_custom_call.1} parent=1 // loop_header_branch
      %24 = sbr.rel (%p22) target = $region8
    $region5: #{tpu_custom_call.1} parent=1 // loop_body
      %s26 = ssub.s32 %s21, 1
      %s27 = ssub.s32 %s21, 2
      %s34 = sadd.s32 1, %s29
      %p35 = scmp.ge.s32.totalorder %s34, 1
      %s36 = scalar_select %p35, 0, %s34
      %s37 = sadd.s32 1, %s28
      %s38 = scalar_select %p35, %s37, %s28
      %p39 = scmp.ge.s32.totalorder %s38, 2
      %s40 = scalar_select %p39, 0, %s38
      %s41 = ssub.s32 %s28, %s40
      %s42 = ssub.s32 %s29, %s36
      %s43 = sor.u32 %s41, %s42
      %p44 = scmp.eq.s32.totalorder %s43, 0
      %s46 = sadd.s32 %s45, 1
      %s47 = scalar_select %p44, %s45, %s46
      %p50 = pneg %p44
      %p51 = scmp.eq.s32.totalorder %s21, 1
      %p52 = por %p50, %p51
      %p53 = scmp.ne.s32.totalorder %s45, %s48
      %p54 = scmp.eq.s32.totalorder %s21, 0
      %p55 = por %p53, %p54
      %p56 = scmp.ne.s32.totalorder %s45, %s48
      %p57 = scmp.eq.s32.totalorder %s26, 1
      %p58 = por %p56, %p57
      %p59 = scmp.ne.s32.totalorder %s48, %s49
      %p60 = scmp.eq.s32.totalorder %s26, 0
      %p61 = por %p59, %p60
      %p62 = scmp.ne.s32.totalorder %s48, %s49
      %p63 = scmp.eq.s32.totalorder %s27, 1
      %p64 = por %p62, %p63
      %p66 = scmp.ne.s32.totalorder %s49, %s65
      %p67 = scmp.eq.s32.totalorder %s27, 0
      %p68 = por %p66, %p67
      %s69 = ssub.s32 %s28, %s40
      %s70 = ssub.s32 %s29, %s36
      %s71 = sor.u32 %s69, %s70
      %p72 = scmp.eq.s32.totalorder %s71, 0
      %s74 = sadd.s32 %s73, 1
      %s75 = scalar_select %p72, %s73, %s74
      %p78 = pneg %p72
      %p79 = scmp.eq.s32.totalorder %s21, 1
      %p80 = por %p78, %p79
      %p81 = scmp.ne.s32.totalorder %s73, %s76
      %p82 = scmp.eq.s32.totalorder %s21, 0
      %p83 = por %p81, %p82
      %p84 = scmp.ne.s32.totalorder %s73, %s76
      %p85 = scmp.eq.s32.totalorder %s26, 1
      %p86 = por %p84, %p85
      %p87 = scmp.ne.s32.totalorder %s76, %s77
      %p88 = scmp.eq.s32.totalorder %s26, 0
      %p89 = por %p87, %p88
      %p90 = scmp.ne.s32.totalorder %s76, %s77
      %p91 = scmp.eq.s32.totalorder %s27, 1
      %p92 = por %p90, %p91
      %p94 = scmp.ne.s32.totalorder %s77, %s93
      %p95 = scmp.eq.s32.totalorder %s27, 0
      %p96 = por %p94, %p95
      %s98 = sadd.s32 %s97, 1
      %p101 = scmp.eq.s32.totalorder %s21, 1
      %p102 = scmp.ne.s32.totalorder %s97, %s99
      %p103 = scmp.eq.s32.totalorder %s21, 0
      %p104 = por %p102, %p103
      %p105 = scmp.ne.s32.totalorder %s97, %s99
      %p106 = scmp.eq.s32.totalorder %s26, 1
      %p107 = por %p105, %p106
      %p108 = scmp.ne.s32.totalorder %s99, %s100
      %p109 = scmp.eq.s32.totalorder %s26, 0
      %p110 = por %p108, %p109
      %p111 = scmp.ne.s32.totalorder %s99, %s100
      %p112 = scmp.eq.s32.totalorder %s27, 1
      %p113 = por %p111, %p112
      %p115 = scmp.ne.s32.totalorder %s100, %s114
      %p116 = scmp.eq.s32.totalorder %s27, 0
      %p117 = por %p115, %p116
      %s119 = sadd.s32 %s118, 1
      %p122 = scmp.eq.s32.totalorder %s21, 1
      %p123 = scmp.ne.s32.totalorder %s118, %s120
      %p124 = scmp.eq.s32.totalorder %s21, 0
      %p125 = por %p123, %p124
      %p126 = scmp.ne.s32.totalorder %s118, %s120
      %p127 = scmp.eq.s32.totalorder %s26, 1
      %p128 = por %p126, %p127
      %p129 = scmp.ne.s32.totalorder %s120, %s121
      %p130 = scmp.eq.s32.totalorder %s26, 0
      %p131 = por %p129, %p130
      %p132 = scmp.ne.s32.totalorder %s120, %s121
      %p133 = scmp.eq.s32.totalorder %s27, 1
      %p134 = por %p132, %p133
      %p136 = scmp.ne.s32.totalorder %s121, %s135
      %p137 = scmp.eq.s32.totalorder %s27, 0
      %p138 = por %p136, %p137
      %s139 = ssub.s32 %s28, %s40
      %s140 = ssub.s32 %s29, %s36
      %s141 = sor.u32 %s139, %s140
      %p142 = scmp.eq.s32.totalorder %s141, 0
      %s144 = sadd.s32 %s143, 1
      %s145 = scalar_select %p142, %s143, %s144
      %p148 = pneg %p142
      %p149 = scmp.eq.s32.totalorder %s21, 1
      %p150 = por %p148, %p149
      %p151 = scmp.ne.s32.totalorder %s143, %s146
      %p152 = scmp.eq.s32.totalorder %s21, 0
      %p153 = por %p151, %p152
      %p154 = scmp.ne.s32.totalorder %s143, %s146
      %p155 = scmp.eq.s32.totalorder %s26, 1
      %p156 = por %p154, %p155
      %p157 = scmp.ne.s32.totalorder %s146, %s147
      %p158 = scmp.eq.s32.totalorder %s26, 0
      %p159 = por %p157, %p158
      %p160 = scmp.ne.s32.totalorder %s146, %s147
      %p161 = scmp.eq.s32.totalorder %s27, 1
      %p162 = por %p160, %p161
      %p164 = scmp.ne.s32.totalorder %s147, %s163
      %p165 = scmp.eq.s32.totalorder %s27, 0
      %p166 = por %p164, %p165
      %p167 = scmp.le.s32.totalorder 1, %s21
      %p168 = scmp.lt.s32.totalorder %s21, 3
      %p169 = pnand %p167, %p168
      %p170 = pneg %p169
      // Predicated region
      $region9: #{tpu_custom_call.1} parent=5 // pred_check
        _
      $region10: #{tpu_custom_call.1} parent=5 // pred_check_branch
        %172 = sbr.rel (%p169) target = $region12
      $region11: #{tpu_custom_call.1} parent=5 // pred_region
        %s173 = ssub.s32 %s21, 1
        // Predicated region
        $region13: #{tpu_custom_call.1} parent=11 // pred_check
          %p174 = pneg %p110
        $region14: #{tpu_custom_call.1} parent=11 // pred_check_branch
          %176 = sbr.rel (%p174) target = $region16
        $region15: #{tpu_custom_call.1} parent=11 // pred_region
          _
        $region16: #{tpu_custom_call.1} parent=11 // pred_fallthru
          _
        // Predicated region
        $region17: #{tpu_custom_call.1} parent=11 // pred_check
          %p177 = pneg %p131
        $region18: #{tpu_custom_call.1} parent=11 // pred_check_branch
          %179 = sbr.rel (%p177) target = $region20
        $region19: #{tpu_custom_call.1} parent=11 // pred_region
          _
        $region20: #{tpu_custom_call.1} parent=11 // pred_fallthru
          _
      $region12: #{tpu_custom_call.1} parent=5 // pred_fallthru
        _
      %p180 = scmp.lt.s32.totalorder %s21, 2
      // Predicated region
      $region21: #{tpu_custom_call.1} parent=5 // pred_check
        %p181 = pneg %p180
      $region22: #{tpu_custom_call.1} parent=5 // pred_check_branch
        %183 = sbr.rel (%p181) target = $region24
      $region23: #{tpu_custom_call.1} parent=5 // pred_region
        // Predicated region
        $region25: #{tpu_custom_call.1} parent=23 // pred_check
          %p184 = pneg %p55
        $region26: #{tpu_custom_call.1} parent=23 // pred_check_branch
          %186 = sbr.rel (%p184) target = $region28
        $region27: #{tpu_custom_call.1} parent=23 // pred_region
          %s187 = sand.u32 %s45, 1
          %s188 = scalar_lea.sflag [#allocation4], %s187
          %s189 = sand.u32 %s45, 1
          %s190 = smul.addr %s189, 8
          %s191 = scalar_lea.vmem [#allocation3], %s190
          %s192 = smul.u32 2, %s29
          %s194 = ssub.s32 128, 128
          %195 = vsyncadd %s188, %s194
          %s196 = smul.addr %s28, 2
          %s197 = sadd.s32 %s192, %s196
          %s198 = smul.addr %s197, 64
          %s199 = scalar_lea.hbm %s0, %s198
          %s201 = sshll.u32 %s191, 4
          %s202 = int_to_ptr.vmem [resolvable:$true] %s201
          %204 = dma.hbm_to_vmem [thread:$0]  %s199, 128, %s202, %s188
        $region28: #{tpu_custom_call.1} parent=23 // pred_fallthru
          _
        // Predicated region
        $region29: #{tpu_custom_call.1} parent=23 // pred_check
          %p205 = pneg %p83
        $region30: #{tpu_custom_call.1} parent=23 // pred_check_branch
          %207 = sbr.rel (%p205) target = $region32
        $region31: #{tpu_custom_call.1} parent=23 // pred_region
          %s208 = sand.u32 %s73, 1
          %s209 = scalar_lea.sflag [#allocation7], %s208
          %s210 = sand.u32 %s73, 1
          %s211 = smul.addr %s210, 8
          %s212 = scalar_lea.vmem [#allocation6], %s211
          %s213 = smul.u32 2, %s29
          %s215 = ssub.s32 128, 128
          %216 = vsyncadd %s209, %s215
          %s217 = smul.addr %s28, 2
          %s218 = sadd.s32 %s213, %s217
          %s219 = smul.addr %s218, 64
          %s220 = scalar_lea.hbm %s1, %s219
          %s222 = sshll.u32 %s212, 4
          %s223 = int_to_ptr.vmem [resolvable:$true] %s222
          %225 = dma.hbm_to_vmem [thread:$0]  %s220, 128, %s223, %s209
        $region32: #{tpu_custom_call.1} parent=23 // pred_fallthru
          _
      $region24: #{tpu_custom_call.1} parent=5 // pred_fallthru
        _
      %p226 = scmp.le.s32.totalorder 1, %s21
      %p227 = scmp.lt.s32.totalorder %s21, 3
      %p228 = pnand %p226, %p227
      %p229 = pneg %p228
      // Predicated region
      $region33: #{tpu_custom_call.1} parent=5 // pred_check
        _
      $region34: #{tpu_custom_call.1} parent=5 // pred_check_branch
        %231 = sbr.rel (%p228) target = $region36
      $region35: #{tpu_custom_call.1} parent=5 // pred_region
        %s232 = ssub.s32 %s21, 1
        %s233 = sand.u32 %s48, 1
        %s234 = scalar_lea.sflag [#allocation4], %s233
        %s235 = sand.u32 %s48, 1
        %s236 = smul.addr %s235, 8
        %s237 = scalar_lea.vmem [#allocation3], %s236
        // Predicated region
        $region37: #{tpu_custom_call.1} parent=35 // pred_check
          %p238 = pneg %p61
        $region38: #{tpu_custom_call.1} parent=35 // pred_check_branch
          %240 = sbr.rel (%p238) target = $region40
        $region39: #{tpu_custom_call.1} parent=35 // pred_region
          %241 = dma.done %s234, 128
        $region40: #{tpu_custom_call.1} parent=35 // pred_fallthru
          _
        %s242 = sand.u32 %s76, 1
        %s243 = scalar_lea.sflag [#allocation7], %s242
        %s244 = sand.u32 %s76, 1
        %s245 = smul.addr %s244, 8
        %s246 = scalar_lea.vmem [#allocation6], %s245
        // Predicated region
        $region41: #{tpu_custom_call.1} parent=35 // pred_check
          %p247 = pneg %p89
        $region42: #{tpu_custom_call.1} parent=35 // pred_check_branch
          %249 = sbr.rel (%p247) target = $region44
        $region43: #{tpu_custom_call.1} parent=35 // pred_region
          %250 = dma.done %s243, 128
        $region44: #{tpu_custom_call.1} parent=35 // pred_fallthru
          _
        %s251 = sand.u32 %s48, 1
        %s252 = scalar_lea.sflag [#allocation4], %s251
        %s253 = sand.u32 %s48, 1
        %s254 = smul.addr %s253, 8
        %s255 = scalar_lea.vmem [#allocation3], %s254
        %p256 = pneg %p61
        %p257 = pneg %p58
        %s258 = sand.u32 %s76, 1
        %s259 = scalar_lea.sflag [#allocation7], %s258
        %s260 = sand.u32 %s76, 1
        %s261 = smul.addr %s260, 8
        %s262 = scalar_lea.vmem [#allocation6], %s261
        %p263 = pneg %p89
        %p264 = pneg %p86
        %p265 = pneg %p110
        %p266 = pneg %p107
        %p267 = pneg %p131
        %p268 = pneg %p128
        %p269 = pneg %p159
        %p270 = pneg %p156
        %s271 = sand.u32 %s146, 1
        %s272 = scalar_lea.sflag [#allocation5], %s271
        %s273 = sand.u32 %s146, 1
        %s274 = smul.addr %s273, 8
        %s275 = scalar_lea.vmem [#allocation8], %s274
        %s276 = smul.u32 2, %s31
        %s277 = smul.u32 2, %s31
        %s278 = smul.u32 2, %s31
        %v279 = vld [vmem:[%s2] sm:$0x1]
        %v280 = vld [vmem:[%s246] sm:$0xff]
        %v281 = vld [vmem:[#allocation2] sm:$0x1]
        %283 = vset.pattern.permute.xlu0 0
        %284 = vperm.xlu0 %283, %v281
        %v285 = vpop.permute.xlu0 %284
        %v287 = vlaneseq
        %v288 = vshrl.u32 %v287, 7
        %v289 = vsub.s32 0, %v288
        %v290 = vrot.slane %v285, %v289
        %v292 = vcombine.high %v280, %v280
        %vm293 = vcmask 31744
        %v295 = vsel %vm293, %v279, 0
        %vm297 = vcmask 1043456
        %v298 = vsel %vm297, %v280, 0
        %v300 = vsel %vm297, %v292, 0
        %302 = vmatprep.subr.mxu0 0.0
        %303 = vmatpush1.msra.mxu0 0.0
        %304 = vmatprep.subr.mxu0 0.0
        %305 = vmatpush1.msra.mxu0 0.0
        %306 = vmatprep.subr.mxu0 0.0
        %307 = vmatpush1.msra.mxu0 0.0
        %308 = vmatprep.subr.mxu0 0.0
        %309 = vmatpush1.msra.mxu0 0.0
        %310 = vmatprep.subr.mxu0 0.0
        %311 = vmatpush1.msra.mxu0 0.0
        %312 = vmatprep.subr.mxu0 0.0
        %313 = vmatpush1.msra.mxu0 0.0
        %314 = vmatprep.subr.mxu0 0.0
        %315 = vmatpush1.msra.mxu0 0.0
        %316 = vmatprep.subr.mxu0 0.0
        %317 = vmatpush1.msra.mxu0 0.0
        %318 = vmatprep.subr.mxu0 0.0
        %319 = vmatpush1.msra.mxu0 0.0
        %320 = vmatprep.subr.mxu0 0.0
        %321 = vmatpush1.msra.mxu0 0.0
        %322 = vmatprep.subr.mxu0 0.0
        %323 = vmatpush1.msra.mxu0 0.0
        %324 = vmatprep.subr.mxu0 0.0
        %325 = vmatpush1.msra.mxu0 0.0
        %326 = vmatprep.subr.mxu0 0.0
        %327 = vmatpush1.msra.mxu0 0.0
        %328 = vmatprep.subr.mxu0 0.0
        %329 = vmatpush1.msra.mxu0 0.0
        %330 = vmatprep.subr.mxu0 0.0
        %331 = vmatpush1.msra.mxu0 0.0
        %332 = vmatprep.subr.mxu0 %v300
        %333 = vmatpush1.msra.mxu0 %v298
        %334 = vmatprep.subr.mxu0 0.0
        %335 = vmatpush2.msra.mxu0 0.0
        %336 = vmatprep.subr.mxu0 0.0
        %337 = vmatpush2.msra.mxu0 0.0
        %338 = vmatprep.subr.mxu0 0.0
        %339 = vmatpush2.msra.mxu0 0.0
        %340 = vmatprep.subr.mxu0 0.0
        %341 = vmatpush2.msra.mxu0 0.0
        %342 = vmatprep.subr.mxu0 0.0
        %343 = vmatpush2.msra.mxu0 0.0
        %344 = vmatprep.subr.mxu0 0.0
        %345 = vmatpush2.msra.mxu0 0.0
        %346 = vmatprep.subr.mxu0 0.0
        %347 = vmatpush2.msra.mxu0 0.0
        %348 = vmatprep.subr.mxu0 0.0
        %349 = vmatpush2.msra.mxu0 0.0
        %350 = vmatprep.subr.mxu0 0.0
        %351 = vmatpush2.msra.mxu0 0.0
        %352 = vmatprep.subr.mxu0 0.0
        %353 = vmatpush2.msra.mxu0 0.0
        %354 = vmatprep.subr.mxu0 0.0
        %355 = vmatpush2.msra.mxu0 0.0
        %356 = vmatprep.subr.mxu0 0.0
        %357 = vmatpush2.msra.mxu0 0.0
        %358 = vmatprep.subr.mxu0 0.0
        %359 = vmatpush2.msra.mxu0 0.0
        %360 = vmatprep.subr.mxu0 0.0
        %361 = vmatpush2.msra.mxu0 0.0
        %362 = vmatprep.subr.mxu0 0.0
        %363 = vmatpush2.msra.mxu0 0.0
        %364 = vmatprep.subr.mxu0 0.0
        %365 = vmatpush2.msra.mxu0 0.0
        %366 = vmatprep.mubr.f32.mxu0 0.0
        %367 = vmatmul.mubr.f32.gmra.mxu0 %v295
        %v368 = vpop.f32.mrf.mxu0
        %v369 = vadd.f32 %v290, %v368
        %v370 = vpop.f32.mrf.mxu0
        %v371 = vadd.f32 %v290, %v370
        %372 = vdwg.mxu0
        %v373 = vtanh.pop %v369
        %v374 = vtanh.pop %v371
        %v375 = vmax.f32 %v373, 0.0
        %v376 = vmax.f32 %v374, 0.0
        %v377 = vld [vmem:[%s237] sm:$0xff]
        %v378 = vlaneseq
        %v379 = vshrl.u32 %v378, 7
        %v380 = vsub.s32 0, %v379
        %v381 = vrot.slane %v375, %v380
        %v382 = vlaneseq
        %v383 = vshrl.u32 %v382, 7
        %v384 = vsub.s32 0, %v383
        %v385 = vrot.slane %v376, %v384
        %v388 = vcombine.low %v381, %v385
        %v390 = vmul.f32 %v377, %v388
        %391 = vst [vmem:[%s275] sm:$0xff] %v390
        %s392 = sand.u32 %s146, 1
        %s393 = scalar_lea.sflag [#allocation5], %s392
        %s394 = sand.u32 %s146, 1
        %s395 = smul.addr %s394, 8
        %s396 = scalar_lea.vmem [#allocation8], %s395
        // Predicated region
        $region45: #{tpu_custom_call.1} parent=35 // pred_check
          %p397 = pneg %p156
        $region46: #{tpu_custom_call.1} parent=35 // pred_check_branch
          %399 = sbr.rel (%p397) target = $region48
        $region47: #{tpu_custom_call.1} parent=35 // pred_region
          %s400 = smul.u32 2, %s31
          %s402 = ssub.s32 128, 128
          %403 = vsyncadd %s393, %s402
          %s404 = smul.addr %s30, 2
          %s405 = sadd.s32 %s400, %s404
          %s406 = smul.addr %s405, 64
          %s407 = scalar_lea.hbm %s4, %s406
          %s409 = sshll.u32 %s396, 4
          %s410 = int_to_ptr.vmem [resolvable:$true] %s409
          %412 = dma.vmem_to_hbm [thread:$0]  %s410, 128, %s407, %s393
        $region48: #{tpu_custom_call.1} parent=35 // pred_fallthru
          _
      $region36: #{tpu_custom_call.1} parent=5 // pred_fallthru
        _
      %p413 = scmp.le.s32.totalorder 2, %s21
      // Predicated region
      $region49: #{tpu_custom_call.1} parent=5 // pred_check
        %p414 = pneg %p413
      $region50: #{tpu_custom_call.1} parent=5 // pred_check_branch
        %416 = sbr.rel (%p414) target = $region52
      $region51: #{tpu_custom_call.1} parent=5 // pred_region
        %s417 = ssub.s32 %s21, 2
        // Predicated region
        $region53: #{tpu_custom_call.1} parent=51 // pred_check
          %p418 = pneg %p162
        $region54: #{tpu_custom_call.1} parent=51 // pred_check_branch
          %420 = sbr.rel (%p418) target = $region56
        $region55: #{tpu_custom_call.1} parent=51 // pred_region
          %s421 = sand.u32 %s147, 1
          %s422 = scalar_lea.sflag [#allocation5], %s421
          %s423 = sand.u32 %s147, 1
          %s424 = smul.addr %s423, 8
          %s425 = scalar_lea.vmem [#allocation8], %s424
          %426 = dma.done %s422, 128
        $region56: #{tpu_custom_call.1} parent=51 // pred_fallthru
          _
      $region52: #{tpu_custom_call.1} parent=5 // pred_fallthru
        _
    $region6: #{tpu_custom_call.1} parent=1 // loop_footer
      %s25 = sadd.s32 1, %s21
    $region7: #{tpu_custom_call.1} parent=1 // loop_footer_branch
      %20 = sbr.rel target = $region3
    $region8: #{tpu_custom_call.1} parent=1 // loop_exit
      _
    %427 = vsyncpa [#allocation4], 1
    %s428 = scalar_lea.sflag [#allocation4], 1
    %429 = vsyncpa %s428, 1
    %430 = vsyncpa [#allocation7], 1
    %s431 = scalar_lea.sflag [#allocation7], 1
    %432 = vsyncpa %s431, 1
    %433 = vsyncpa [#allocation5], 1
    %s434 = scalar_lea.sflag [#allocation5], 1
    %435 = vsyncpa %s434, 1

</llo_original>
